<compile_context>
chip_gen: v7x
topology: tpu7x:2x2x1
jax: 0.10.0
libtpu: 0.0.40
codegen_flags: <defaults>
</compile_context>

<pallas_src>
import functools

import jax
import jax.numpy as jnp
from jax.experimental import pallas as pl
from jax.experimental.pallas import tpu as pltpu

LANES = 128
VMEM_LIMIT_BYTES = 48 * 1024 * 1024  # explicit headroom on all generations


def _pick_max_tile_rows():
    """8192 rows (4 MiB/buffer) on v6e/v7x; 4096 (2 MiB) on v5*."""
    try:
        kind = jax.devices()[0].device_kind.lower()
    except Exception:
        kind = ""
    if "v5" in kind:
        return 4096
    return 8192


def _bce_kernel(pw_ref, logits_ref, target_ref, out_ref, acc_ref, *,
                rows_total, tile_rows):
    s = pl.program_id(0)          # split (parallel) axis
    j = pl.program_id(1)          # reduction (arbitrary) axis
    nj = pl.num_programs(1)

    @pl.when(j == 0)
    def _():
        acc_ref[...] = jnp.zeros_like(acc_ref)

    x = logits_ref[...].astype(jnp.float32)
    t = target_ref[...].astype(jnp.float32)
    pw = pw_ref[0]

    # Numerically stable log(sigmoid(x)); log(1 - sigmoid(x)) = log_p - x.
    log_p = jnp.minimum(x, 0.0) - jnp.log1p(jnp.exp(-jnp.abs(x)))
    # -pw*t*log_p - (1-t)*(log_p - x)  ==  (1-t)*x - (1 + (pw-1)*t)*log_p
    loss = (1.0 - t) * x - (1.0 + (pw - 1.0) * t) * log_p

    def fold(v):
        # Fold the (tile_rows, 128) tile into the vreg-shaped accumulator.
        r8 = (tile_rows // 8) * 8
        if r8:
            acc_ref[...] += v[:r8].reshape(r8 // 8, 8, LANES).sum(axis=0)
        if tile_rows != r8:   # only possible for tiny single-block inputs
            acc_ref[0:1, :] += v[r8:].sum(axis=0, keepdims=True)

    # Logical (unclamped) block index; blocks past rows_total are duplicates
    # produced by the clamped index_map and must contribute zero.
    blk = s * nj + j
    row_base = blk * tile_rows
    is_full = row_base + tile_rows <= rows_total

    @pl.when(is_full)
    def _():
        fold(loss)                      # interior fast path: no mask work

    @pl.when(jnp.logical_not(is_full))
    def _():
        row_idx = jax.lax.broadcasted_iota(jnp.int32, (tile_rows, LANES), 0)
        fold(jnp.where(row_base + row_idx < rows_total, loss, 0.0))

    @pl.when(j == nj - 1)
    def _():
        # Single tiny cross-lane/sublane reduce per split.
        out_ref[...] = jnp.sum(acc_ref[...]).reshape(1, 1)


def bce_loss_with_logits(logits, target, pos_weight=1.0, reduction="mean",
                         max_tile_rows=None):
    """Pallas TPU implementation of BCELosswithLogits.forward (reduced variants)."""
    assert logits.shape == target.shape
    n_elem = logits.size
    pw_arr = jnp.asarray(pos_weight, jnp.float32).reshape(1)

    flat_l = jnp.ravel(logits)
    flat_t = jnp.ravel(target)

    rows = n_elem // LANES
    main = rows * LANES
    tail = n_elem - main

    total = jnp.zeros((), jnp.float32)

    if rows > 0:
        l2d = flat_l[:main].reshape(rows, LANES)
        t2d = flat_t[:main].reshape(rows, LANES)

        max_rows = max_tile_rows if max_tile_rows is not None else _pick_max_tile_rows()
        tile_rows = rows if rows <= max_rows else max_rows
        total_blocks = pl.cdiv(rows, tile_rows)

        # Unconditional 2-way split whenever there is more than one block so
        # v7x's two TensorCores both stream data (harmless on 1-TC chips).
        num_splits = 2 if total_blocks >= 2 else 1
        blocks_per_split = pl.cdiv(total_blocks, num_splits)

        if num_splits * blocks_per_split == total_blocks:
            def tile_map(s, j):
                return (s * blocks_per_split + j, 0)
        else:
            # Uneven split: clamp the block index (re-reads the last real block);
            # the duplicated block is fully masked to zero in-kernel.
            def tile_map(s, j):
                return (jnp.minimum(s * blocks_per_split + j, total_blocks - 1), 0)

        kernel = functools.partial(_bce_kernel, rows_total=rows,
                                   tile_rows=tile_rows)

        partials = pl.pallas_call(
            kernel,
            out_shape=jax.ShapeDtypeStruct((num_splits, 1), jnp.float32),
            grid_spec=pltpu.PrefetchScalarGridSpec(
                num_scalar_prefetch=0,
                grid=(num_splits, blocks_per_split),
                in_specs=[
                    pl.BlockSpec(memory_space=pltpu.MemorySpace.SMEM),  # pos_weight
                    pl.BlockSpec((tile_rows, LANES), tile_map),
                    pl.BlockSpec((tile_rows, LANES), tile_map),
                ],
                out_specs=pl.BlockSpec((1, 1), lambda s, j: (s, 0)),
                scratch_shapes=[pltpu.VMEM((8, LANES), jnp.float32)],
            ),
            compiler_params=pltpu.CompilerParams(
                dimension_semantics=("parallel", "arbitrary"),
                vmem_limit_bytes=VMEM_LIMIT_BYTES),
        )(pw_arr, l2d, t2d)
        total = total + jnp.sum(partials)

    if tail:
        # <128-element tail folded in with plain jnp (no full-array pad copy).
        lt = flat_l[main:].astype(jnp.float32)
        tt = flat_t[main:].astype(jnp.float32)
        log_p_t = jnp.minimum(lt, 0.0) - jnp.log1p(jnp.exp(-jnp.abs(lt)))
        total = total + jnp.sum(
            (1.0 - tt) * lt - (1.0 + (pw_arr[0] - 1.0) * tt) * log_p_t)

    if reduction == "mean":
        return total / n_elem
    elif reduction == "sum":
        return total
    # TODO(synk): reduction='none' (per-element loss tensor) not implemented in-kernel.
    return total


def _reference(logits, target, pos_weight=1.0, reduction="mean"):
    p = jax.nn.sigmoid(logits.astype(jnp.float32))
    t = target.astype(jnp.float32)
    loss = -pos_weight * t * jnp.log(p) - (1.0 - t) * jnp.log(1.0 - p)
    return loss.mean() if reduction == "mean" else loss.sum()


if __name__ == "__main__":
    key = jax.random.PRNGKey(0)
    k1, k2, k3, k4, k5, k6 = jax.random.split(key, 6)

    # 1) NCHW shape as produced by the GAN's conv discriminator.
    logits = jax.random.normal(k1, (2, 4, 16, 16), dtype=jnp.float32)
    target = jax.random.uniform(k2, (2, 4, 16, 16), dtype=jnp.float32)
    out = jax.block_until_ready(
        bce_loss_with_logits(logits, target, pos_weight=1.0, reduction="mean"))
    ref = _reference(logits, target)
    assert jnp.allclose(out, ref, rtol=1e-5, atol=1e-5), (out, ref)

    # 2) Multi-block + uneven 2-way split + edge-masked tile (tiny forced tiles).
    logits2 = jax.random.normal(k3, (2, 4, 16, 17), dtype=jnp.float32)
    target2 = jax.random.uniform(k4, (2, 4, 16, 17), dtype=jnp.float32)
    out2 = jax.block_until_ready(
        bce_loss_with_logits(logits2, target2, reduction="sum", max_tile_rows=8))
    ref2 = _reference(logits2, target2, reduction="sum")
    assert jnp.allclose(out2, ref2, rtol=1e-5, atol=1e-4), (out2, ref2)

    # 3) Non-multiple-of-128 size (tail path), pos_weight != 1, odd row count.
    logits3 = jax.random.normal(k5, (5, 3, 7, 11), dtype=jnp.float32)
    target3 = jax.random.uniform(k6, (5, 3, 7, 11), dtype=jnp.float32)
    out3 = jax.block_until_ready(
        bce_loss_with_logits(logits3, target3, pos_weight=2.5, reduction="mean"))
    ref3 = _reference(logits3, target3, pos_weight=2.5)
    assert jnp.allclose(out3, ref3, rtol=1e-5, atol=1e-5), (out3, ref3)

    print("KERNEL_OK")
</pallas_src>

<mosaic_0001>
module attributes {stable_mosaic.version = 11 : i64} {
  func.func @_bce_kernel(%arg0: i32, %arg1: i32, %arg2: memref<1xf32, #tpu.memory_space<smem>>, %arg3: memref<16x128xf32, #tpu.memory_space<vmem>>, %arg4: memref<16x128xf32, #tpu.memory_space<vmem>>, %arg5: memref<1x1xf32, #tpu.memory_space<vmem>>, %arg6: memref<8x128xf32, #tpu.memory_space<vmem>>) attributes {dimension_semantics = [#tpu.dimension_semantics<parallel>, #tpu.dimension_semantics<arbitrary>], iteration_bounds = array<i64: 1, 1>, scalar_prefetch = 0 : i64, scratch_operands = 1 : i64, tpu.core_type = #tpu.core_type<tc>, window_params = [{transform_indices = @transform_0, window_bounds = array<i64: 1>}, {transform_indices = @transform_1, window_bounds = array<i64: 16, 128>}, {transform_indices = @transform_2, window_bounds = array<i64: 16, 128>}, {transform_indices = @transform_3, window_bounds = array<i64: 1, 1>}]} {
    %c0_i32 = arith.constant 0 : i32
    %0 = arith.cmpi eq, %arg1, %c0_i32 : i32
    %1 = arith.extui %0 : i1 to i32
    %c0_i32_0 = arith.constant 0 : i32
    %2 = arith.cmpi ne, %1, %c0_i32_0 : i32
    scf.if %2 {
      %cst_15 = arith.constant 0.000000e+00 : f32
      %37 = vector.broadcast %cst_15 : f32 to vector<8x128xf32>
      %c0_16 = arith.constant 0 : index
      %c0_17 = arith.constant 0 : index
      %38 = vector.load %arg6[%c0_16, %c0_17] : memref<8x128xf32, #tpu.memory_space<vmem>>, vector<8x128xf32>
      tpu.vector_store %arg6[%c0_16, %c0_17], %37 {strides = array<i32>} : memref<8x128xf32, #tpu.memory_space<vmem>>, vector<8x128xf32>,
    } else {
    }
    %c0 = arith.constant 0 : index
    %c0_1 = arith.constant 0 : index
    %3 = vector.load %arg3[%c0, %c0_1] : memref<16x128xf32, #tpu.memory_space<vmem>>, vector<16x128xf32>
    %c0_2 = arith.constant 0 : index
    %c0_3 = arith.constant 0 : index
    %4 = vector.load %arg4[%c0_2, %c0_3] : memref<16x128xf32, #tpu.memory_space<vmem>>, vector<16x128xf32>
    %c0_4 = arith.constant 0 : index
    %5 = memref.load %arg2[%c0_4] : memref<1xf32, #tpu.memory_space<smem>>
    %cst = arith.constant 0.000000e+00 : f32
    %6 = vector.broadcast %cst : f32 to vector<16x128xf32>
    %7 = arith.minimumf %3, %6 : vector<16x128xf32>
    %8 = math.absf %3 : vector<16x128xf32>
    %cst_5 = arith.constant 0.000000e+00 : f32
    %9 = vector.broadcast %cst_5 : f32 to vector<16x128xf32>
    %10 = arith.subf %9, %8 : vector<16x128xf32>
    %11 = math.exp %10 : vector<16x128xf32>
    %12 = math.log1p %11 : vector<16x128xf32>
    %13 = arith.subf %7, %12 : vector<16x128xf32>
    %cst_6 = arith.constant 1.000000e+00 : f32
    %14 = vector.broadcast %cst_6 : f32 to vector<16x128xf32>
    %15 = arith.subf %14, %4 : vector<16x128xf32>
    %16 = arith.mulf %15, %3 : vector<16x128xf32>
    %cst_7 = arith.constant 1.000000e+00 : f32
    %17 = arith.subf %5, %cst_7 : f32
    %18 = vector.broadcast %17 : f32 to vector<16x128xf32>
    %19 = arith.mulf %18, %4 : vector<16x128xf32>
    %cst_8 = arith.constant 1.000000e+00 : f32
    %20 = vector.broadcast %cst_8 : f32 to vector<16x128xf32>
    %21 = arith.addf %20, %19 : vector<16x128xf32>
    %22 = arith.mulf %21, %13 : vector<16x128xf32>
    %23 = arith.subf %16, %22 : vector<16x128xf32>
    %c1_i32 = arith.constant 1 : i32
    %24 = arith.muli %arg0, %c1_i32 : i32
    %25 = arith.addi %24, %arg1 : i32
    %c16_i32 = arith.constant 16 : i32
    %26 = arith.muli %25, %c16_i32 : i32
    %c16_i32_9 = arith.constant 16 : i32
    %27 = arith.addi %26, %c16_i32_9 : i32
    %c16_i32_10 = arith.constant 16 : i32
    %28 = arith.cmpi sle, %27, %c16_i32_10 : i32
    %29 = arith.extui %28 : i1 to i32
    %c0_i32_11 = arith.constant 0 : i32
    %30 = arith.cmpi ne, %29, %c0_i32_11 : i32
    scf.if %30 {
      %c0_15 = arith.constant 0 : index
      %c0_16 = arith.constant 0 : index
      %37 = vector.load %arg6[%c0_15, %c0_16] : memref<8x128xf32, #tpu.memory_space<vmem>>, vector<8x128xf32>
      %38 = vector.shape_cast %23 : vector<16x128xf32> to vector<2x8x128xf32>
      %cst_17 = arith.constant dense<0.000000e+00> : vector<8x128xf32>
      %39 = vector.multi_reduction <add>, %38, %cst_17 [0] : vector<2x8x128xf32> to vector<8x128xf32>
      %40 = arith.addf %37, %39 : vector<8x128xf32>
      %c0_18 = arith.constant 0 : index
      %c0_19 = arith.constant 0 : index
      %41 = vector.load %arg6[%c0_18, %c0_19] : memref<8x128xf32, #tpu.memory_space<vmem>>, vector<8x128xf32>
      tpu.vector_store %arg6[%c0_18, %c0_19], %40 {strides = array<i32>} : memref<8x128xf32, #tpu.memory_space<vmem>>, vector<8x128xf32>,
    } else {
    }
    %true = arith.constant true
    %31 = arith.xori %28, %true : i1
    %32 = arith.extui %31 : i1 to i32
    %c0_i32_12 = arith.constant 0 : i32
    %33 = arith.cmpi ne, %32, %c0_i32_12 : i32
    scf.if %33 {
      %37 = tpu.iota {dimensions = array<i32: 0>} : vector<16x128xi32>
      %38 = vector.broadcast %26 : i32 to vector<16x128xi32>
      %39 = arith.addi %38, %37 : vector<16x128xi32>
      %c16_i32_15 = arith.constant 16 : i32
      %40 = vector.broadcast %c16_i32_15 : i32 to vector<16x128xi32>
      %41 = arith.cmpi slt, %39, %40 : vector<16x128xi32>
      %cst_16 = arith.constant 0.000000e+00 : f32
      %42 = vector.broadcast %cst_16 : f32 to vector<16x128xf32>
      %43 = arith.select %41, %23, %42 : vector<16x128xi1>, vector<16x128xf32>
      %c0_17 = arith.constant 0 : index
      %c0_18 = arith.constant 0 : index
      %44 = vector.load %arg6[%c0_17, %c0_18] : memref<8x128xf32, #tpu.memory_space<vmem>>, vector<8x128xf32>
      %45 = vector.shape_cast %43 : vector<16x128xf32> to vector<2x8x128xf32>
      %cst_19 = arith.constant dense<0.000000e+00> : vector<8x128xf32>
      %46 = vector.multi_reduction <add>, %45, %cst_19 [0] : vector<2x8x128xf32> to vector<8x128xf32>
      %47 = arith.addf %44, %46 : vector<8x128xf32>
      %c0_20 = arith.constant 0 : index
      %c0_21 = arith.constant 0 : index
      %48 = vector.load %arg6[%c0_20, %c0_21] : memref<8x128xf32, #tpu.memory_space<vmem>>, vector<8x128xf32>
      tpu.vector_store %arg6[%c0_20, %c0_21], %47 {strides = array<i32>} : memref<8x128xf32, #tpu.memory_space<vmem>>, vector<8x128xf32>,
    } else {
    }
    %c0_i32_13 = arith.constant 0 : i32
    %34 = arith.cmpi eq, %arg1, %c0_i32_13 : i32
    %35 = arith.extui %34 : i1 to i32
    %c0_i32_14 = arith.constant 0 : i32
    %36 = arith.cmpi ne, %35, %c0_i32_14 : i32
    scf.if %36 {
      %c0_15 = arith.constant 0 : index
      %c0_16 = arith.constant 0 : index
      %37 = vector.load %arg6[%c0_15, %c0_16] : memref<8x128xf32, #tpu.memory_space<vmem>>, vector<8x128xf32>
      %38 = vector.shape_cast %37 : vector<8x128xf32> to vector<1x8x128xf32>
      %cst_17 = arith.constant dense<0.000000e+00> : vector<1xf32>
      %39 = vector.multi_reduction <add>, %38, %cst_17 [1, 2] : vector<1x8x128xf32> to vector<1xf32>
      %40 = vector.shape_cast %39 : vector<1xf32> to vector<1x1x1xf32>
      %41 = vector.extract %40[0, 0, 0] : f32 from vector<1x1x1xf32>
      %42 = vector.broadcast %41 : f32 to vector<1x1xf32>
      %c0_18 = arith.constant 0 : index
      %c0_19 = arith.constant 0 : index
      %43 = vector.load %arg5[%c0_18, %c0_19] : memref<1x1xf32, #tpu.memory_space<vmem>>, vector<1x1xf32>
      tpu.vector_store %arg5[%c0_18, %c0_19], %42 {strides = array<i32>} : memref<1x1xf32, #tpu.memory_space<vmem>>, vector<1x1xf32>,
    } else {
    }
    return
  }
  func.func @transform_0(%arg0: i32, %arg1: i32) -> i32 {
    %c0_i32 = arith.constant 0 : i32
    %c0_i32_0 = arith.constant 0 : i32
    return %c0_i32 : i32
  }
  func.func @transform_1(%arg0: i32, %arg1: i32) -> (i32, i32) {
    %c1_i32 = arith.constant 1 : i32
    %0 = arith.muli %arg0, %c1_i32 : i32
    %1 = arith.addi %0, %arg1 : i32
    %c0_i32 = arith.constant 0 : i32
    %c0_i32_0 = arith.constant 0 : i32
    return %1, %c0_i32 : i32, i32
  }
  func.func @transform_2(%arg0: i32, %arg1: i32) -> (i32, i32) {
    %c1_i32 = arith.constant 1 : i32
    %0 = arith.muli %arg0, %c1_i32 : i32
    %1 = arith.addi %0, %arg1 : i32
    %c0_i32 = arith.constant 0 : i32
    %c0_i32_0 = arith.constant 0 : i32
    return %1, %c0_i32 : i32, i32
  }
  func.func @transform_3(%arg0: i32, %arg1: i32) -> (i32, i32) {
    %c0_i32 = arith.constant 0 : i32
    %c0_i32_0 = arith.constant 0 : i32
    return %arg0, %c0_i32 : i32, i32
  }
}

</mosaic_0001>

<llo_original>
// kernel: tpu_custom_call.1
$region0: #{tpu_custom_call.1}
  #allocation0 [shape = 'u32[]', space=smem, size = 0x4, offset = 0x4, fixed_abs, tag = 'smem constant byte address 0x4 - core index']
  #allocation1 [shape = 'u32[144,128]{1,0:T(1,128)}', space=vmem, size = 0x12000, scoped, tag = 'internal scratch']
  #allocation2 [shape = 'f32[8,128]{1,0:T(8,128)}', space=vmem, size = 0x1000, scoped, tag = 'scratch operand']
  #allocation3 [shape = 'f32[1]{0:T(128)S(6)}', space=smem, size = 0x200, scoped, tag = 'scoped memory for tpu_custom_call.1']
  %s0 = inlined_call_operand.<no memory space> [shape: f32[1], index: 0, kind: input, shape index: {}]
  %s1 = inlined_call_operand.hbm [shape: f32[16,128], index: 1, kind: input, shape index: {}]
  %s2 = inlined_call_operand.hbm [shape: f32[16,128], index: 2, kind: input, shape index: {}]
  %s3 = inlined_call_operand.hbm [shape: f32[1,1], index: 3, kind: output, shape index: {}]
  %s4 = sld [smem:[#allocation0]]
  $region46: #{tpu_custom_call.1} parent=0
    _
  %s6 = ssub.s32 1, %s4
  %s7 = scalar_select 0, %s6, %s4
  %8 = sst [smem:[#allocation3]] %s0
  $region1: #{tpu_custom_call.1} parent=0
    #allocation4 [shape = 'u8[8192]{0}', space=vmem, size = 0x2000, scoped, tag = 'input window, operand 1, single buffered']
    #allocation5 [shape = 's32[1]{0}', space=sflag, size = 0x4, scoped, tag = 'scoped memory for tpu_custom_call.1']
    #allocation6 [shape = 's32[1]{0}', space=sflag, size = 0x4, scoped, tag = 'scoped memory for tpu_custom_call.1']
    #allocation7 [shape = 'u8[8192]{0}', space=vmem, size = 0x2000, scoped, tag = 'input window, operand 2, single buffered']
    #allocation8 [shape = 's32[1]{0}', space=sflag, size = 0x4, scoped, tag = 'scoped memory for tpu_custom_call.1']
    #allocation9 [shape = 'u8[512]{0}', space=vmem, size = 0x400, scoped, tag = 'output window, operand 0, single buffered']
    %9 = vsyncpa [#allocation5], 0
    %10 = vsyncpa [#allocation8], 0
    %11 = vsyncpa [#allocation6], 0
    // Predicated region
    $region2: #{tpu_custom_call.1} parent=1 // pred_check
      _
    $region3: #{tpu_custom_call.1} parent=1 // pred_check_branch
      %13 = sbr.rel (0) target = $region5
    $region4: #{tpu_custom_call.1} parent=1 // pred_region
      _
    $region5: #{tpu_custom_call.1} parent=1 // pred_fallthru
      _
    // Predicated region
    $region6: #{tpu_custom_call.1} parent=1 // pred_check
      _
    $region7: #{tpu_custom_call.1} parent=1 // pred_check_branch
      %15 = sbr.rel (0) target = $region9
    $region8: #{tpu_custom_call.1} parent=1 // pred_region
      %s16 = sadd.s32 0, 0
      %s17 = smul.u32 2, %s16
      %s19 = ssub.s32 256, 256
      %20 = vsyncadd [#allocation5], %s19
      %s21 = smul.addr %s17, 128
      %s22 = scalar_lea.hbm %s1, %s21
      %s23 = sshll.u32 [#allocation4], 4
      %s24 = int_to_ptr.vmem [resolvable:$true] %s23
      %29 = dma.hbm_to_vmem [thread:$0]  %s22, 256, %s24, [#allocation5], 128, 128, 8
    $region9: #{tpu_custom_call.1} parent=1 // pred_fallthru
      _
    // Predicated region
    $region10: #{tpu_custom_call.1} parent=1 // pred_check
      _
    $region11: #{tpu_custom_call.1} parent=1 // pred_check_branch
      %31 = sbr.rel (0) target = $region13
    $region12: #{tpu_custom_call.1} parent=1 // pred_region
      %s32 = sadd.s32 0, 0
      %s33 = smul.u32 2, %s32
      %s35 = ssub.s32 256, 256
      %36 = vsyncadd [#allocation8], %s35
      %s37 = smul.addr %s33, 128
      %s38 = scalar_lea.hbm %s2, %s37
      %s39 = sshll.u32 [#allocation7], 4
      %s40 = int_to_ptr.vmem [resolvable:$true] %s39
      %45 = dma.hbm_to_vmem [thread:$0]  %s38, 256, %s40, [#allocation8], 128, 128, 8
    $region13: #{tpu_custom_call.1} parent=1 // pred_fallthru
      _
    // Predicated region
    $region14: #{tpu_custom_call.1} parent=1 // pred_check
      _
    $region15: #{tpu_custom_call.1} parent=1 // pred_check_branch
      %47 = sbr.rel (0) target = $region17
    $region16: #{tpu_custom_call.1} parent=1 // pred_region
      %48 = dma.done [#allocation5], 256
    $region17: #{tpu_custom_call.1} parent=1 // pred_fallthru
      _
    // Predicated region
    $region18: #{tpu_custom_call.1} parent=1 // pred_check
      _
    $region19: #{tpu_custom_call.1} parent=1 // pred_check_branch
      %50 = sbr.rel (0) target = $region21
    $region20: #{tpu_custom_call.1} parent=1 // pred_region
      %51 = dma.done [#allocation8], 256
    $region21: #{tpu_custom_call.1} parent=1 // pred_fallthru
      _
    %s52 = sadd.s32 0, 0
    %s53 = smul.u32 2, %s52
    %s54 = sadd.s32 0, 0
    %s55 = smul.u32 2, %s54
    %p56 = scmp.eq.s32.totalorder 0, 0
    // Predicated region
    $region22: #{tpu_custom_call.1} parent=1 // pred_check
      %p57 = pneg %p56
    $region23: #{tpu_custom_call.1} parent=1 // pred_check_branch
      %59 = sbr.rel (%p57) target = $region25
    $region24: #{tpu_custom_call.1} parent=1 // pred_region
      %60 = vst [vmem:[#allocation2] sm:$0xff] 0.0
    $region25: #{tpu_custom_call.1} parent=1 // pred_fallthru
      _
    %v61 = vld [vmem:[#allocation4] sm:$0xff]
    %v62 = vld [vmem:[#allocation4 + $0x8] sm:$0xff]
    %v63 = vld [vmem:[#allocation7] sm:$0xff]
    %v64 = vld [vmem:[#allocation7 + $0x8] sm:$0xff]
    %s65 = sld [smem:[#allocation3]]
    %v66 = vmin.f32 %v61, 0.0
    %v67 = vmin.f32 %v62, 0.0
    %v68 = vand.u32 2147483647, %v61
    %v69 = vand.u32 2147483647, %v62
    %v70 = vsub.f32 0.0, %v68
    %v71 = vsub.f32 0.0, %v69
    %v72 = vmul.f32 %v70, 1.442695
    %v73 = vpow.pop %v72
    %v74 = vmul.f32 %v71, 1.442695
    %v75 = vpow.pop %v74
    %v76 = vadd.f32 %v73, 1.0
    %v77 = vlog2.pop %v76
    %v78 = vmul.f32 %v77, 0.6931472
    %v79 = vmul.f32 -0.5, %v73
    %v80 = vadd.f32 %v79, 1.0
    %v81 = vmul.f32 %v80, %v73
    %v82 = vand.u32 2147483647, %v73
    %vm83 = vcmp.lt.f32.partialorder %v82, 0.0004427343
    %v84 = vsel %vm83, %v81, %v78
    %v85 = vadd.f32 %v75, 1.0
    %v86 = vlog2.pop %v85
    %v87 = vmul.f32 %v86, 0.6931472
    %v88 = vmul.f32 -0.5, %v75
    %v89 = vadd.f32 %v88, 1.0
    %v90 = vmul.f32 %v89, %v75
    %v91 = vand.u32 2147483647, %v75
    %vm92 = vcmp.lt.f32.partialorder %v91, 0.0004427343
    %v93 = vsel %vm92, %v90, %v87
    %v94 = vsub.f32 %v66, %v84
    %v95 = vsub.f32 %v67, %v93
    %v96 = vsub.f32 1.0, %v63
    %v97 = vsub.f32 1.0, %v64
    %v98 = vmul.f32 %v96, %v61
    %v99 = vmul.f32 %v97, %v62
    %s100 = ssub.f32 %s65, 1.0
    %v101 = vstv %s100
    %v102 = vmul.f32 %v101, %v63
    %v103 = vmul.f32 %v101, %v64
    %v104 = vadd.f32 %v102, 1.0
    %v105 = vadd.f32 %v103, 1.0
    %v106 = vmul.f32 %v104, %v94
    %v107 = vmul.f32 %v105, %v95
    %v108 = vsub.f32 %v98, %v106
    %v109 = vsub.f32 %v99, %v107
    %s110 = sadd.s32 0, 0
    %s111 = smul.u32 %s110, 16
    %s112 = sadd.s32 %s111, 16
    %p113 = scmp.le.s32.totalorder %s112, 16
    // Predicated region
    $region26: #{tpu_custom_call.1} parent=1 // pred_check
      %p114 = pneg %p113
    $region27: #{tpu_custom_call.1} parent=1 // pred_check_branch
      %116 = sbr.rel (%p114) target = $region29
    $region28: #{tpu_custom_call.1} parent=1 // pred_region
      %v117 = vld [vmem:[#allocation2] sm:$0xff]
      %v118 = vadd.f32 %v108, %v109
      %v119 = vadd.f32 %v117, %v118
      %120 = vst [vmem:[#allocation2] sm:$0xff] %v119
    $region29: #{tpu_custom_call.1} parent=1 // pred_fallthru
      _
    %p121 = scmp.gt.s32.totalorder %s112, 16
    // Predicated region
    $region30: #{tpu_custom_call.1} parent=1 // pred_check
      %p122 = pneg %p121
    $region31: #{tpu_custom_call.1} parent=1 // pred_check_branch
      %124 = sbr.rel (%p122) target = $region33
    $region32: #{tpu_custom_call.1} parent=1 // pred_region
      %v125 = vlaneseq
      %v126 = vshrl.u32 %v125, 7
      %v127 = vadd.s32 %v126, 8
      %v128 = vstv %s111
      %v129 = vadd.s32 %v128, %v126
      %v130 = vadd.s32 %v128, %v127
      %vm131 = vcmp.lt.s32.totalorder %v129, 16
      %vm132 = vcmp.lt.s32.totalorder %v130, 16
      %v133 = vsel %vm131, %v108, 0.0
      %v134 = vsel %vm132, %v109, 0.0
      %v135 = vld [vmem:[#allocation2] sm:$0xff]
      %v136 = vadd.f32 %v133, %v134
      %v137 = vadd.f32 %v135, %v136
      %138 = vst [vmem:[#allocation2] sm:$0xff] %v137
    $region33: #{tpu_custom_call.1} parent=1 // pred_fallthru
      _
    // Predicated region
    $region34: #{tpu_custom_call.1} parent=1 // pred_check
      %p139 = pneg %p56
    $region35: #{tpu_custom_call.1} parent=1 // pred_check_branch
      %141 = sbr.rel (%p139) target = $region37
    $region36: #{tpu_custom_call.1} parent=1 // pred_region
      %v142 = vld [vmem:[#allocation2] sm:$0xff]
      %143 = vadd.xlane.f32.xlu0 %v142
      %v144 = vpop.xlane.xlu0 %143
      %v145 = vrot.slane %v144, 4
      %v146 = vadd.f32 %v144, %v145
      %v147 = vrot.slane %v146, 2
      %v148 = vadd.f32 %v146, %v147
      %v149 = vrot.slane %v148, 1
      %v150 = vadd.f32 %v148, %v149
      %s151 = vtos %v150
      %v152 = vstv %s151
      %vm153 = vcmask 0
      %154 = vst.msk [vmem:[#allocation9] sm:$0x1] %vm153, %v152
    $region37: #{tpu_custom_call.1} parent=1 // pred_fallthru
      _
    // Predicated region
    $region38: #{tpu_custom_call.1} parent=1 // pred_check
      _
    $region39: #{tpu_custom_call.1} parent=1 // pred_check_branch
      %156 = sbr.rel (0) target = $region41
    $region40: #{tpu_custom_call.1} parent=1 // pred_region
      %s158 = ssub.s32 16, 16
      %159 = vsyncadd [#allocation6], %s158
      %s161 = sshll.u32 [#allocation9], 4
      %s162 = int_to_ptr.vmem [resolvable:$true] %s161
      %164 = dma.vmem_to_hbm [thread:$0]  %s162, 16, %s3, [#allocation6]
    $region41: #{tpu_custom_call.1} parent=1 // pred_fallthru
      _
    // Predicated region
    $region42: #{tpu_custom_call.1} parent=1 // pred_check
      _
    $region43: #{tpu_custom_call.1} parent=1 // pred_check_branch
      %166 = sbr.rel (0) target = $region45
    $region44: #{tpu_custom_call.1} parent=1 // pred_region
      %167 = dma.done [#allocation6], 16
    $region45: #{tpu_custom_call.1} parent=1 // pred_fallthru
      _
    %168 = vsyncpa [#allocation5], 1
    %169 = vsyncpa [#allocation8], 1
    %170 = vsyncpa [#allocation6], 1

</llo_original>
